<compile_context>
chip_gen: v6e
topology: v6e:2x2x1
jax: 0.10.0
libtpu: 0.0.40
codegen_flags: <defaults>
</compile_context>

<pallas_src>
import functools
import math

import jax
import jax.numpy as jnp
from jax.experimental import pallas as pl
from jax.experimental.pallas import tpu as pltpu

EPS = 1e-5  # nn.LayerNorm(eps=1e-05) per the module


def _patch_merging_kernel(x_ref, we_ref, wo_ref, aux_ref, o_ref):
    # x_ref:   (tile_r, 2, W2, 2C)  raw tokens; dim1 = source-row parity, lanes = [dw=0 C | dw=1 C]
    # we_ref:  (2C, 2C)             gamma-folded W^T rows for the even-row chunks [x0 | x2]
    # wo_ref:  (2C, 2C)             gamma-folded W^T rows for the odd-row chunks  [x1 | x3]
    # aux_ref: (2, 2C) f32          row 0 = column sums of gamma-folded W^T, row 1 = beta @ W^T
    # o_ref:   (tile_r * W2, 2C)    flattened, lane/sublane-dense output block
    tile_r, _, w2, twoc = x_ref.shape
    m = tile_r * w2
    n_out = o_ref.shape[-1]

    x = x_ref[...]
    # Even/odd source rows -> [x0 | x2] / [x1 | x3].  This reshape is a pure retiling when
    # W2 % 8 == 0; otherwise it is a one-off in-VMEM relayout of the tile (accepted cost).
    xe = x[:, 0].reshape(m, twoc)
    xo = x[:, 1].reshape(m, twoc)

    # MXU matmuls on native-dtype operands, f32 accumulation.
    acc = jnp.dot(xe, we_ref[...], preferred_element_type=jnp.float32)
    acc = acc + jnp.dot(xo, wo_ref[...], preferred_element_type=jnp.float32)

    # One-pass LayerNorm statistics over the full 4C feature vector.
    # Plain sums accumulate in f32 on the native-dtype operand; only the squared term upcasts.
    inv_n = 1.0 / (2.0 * twoc)  # 1 / (4C)
    s = (jnp.sum(xe, axis=-1, keepdims=True, dtype=jnp.float32)
         + jnp.sum(xo, axis=-1, keepdims=True, dtype=jnp.float32))
    xe32 = xe.astype(jnp.float32)
    xo32 = xo.astype(jnp.float32)
    ss = (jnp.sum(xe32 * xe32, axis=-1, keepdims=True)
          + jnp.sum(xo32 * xo32, axis=-1, keepdims=True))
    mean = s * inv_n
    var = jnp.maximum(ss * inv_n - mean * mean, 0.0)
    inv_std = jax.lax.rsqrt(var + EPS)

    colsum = aux_ref[0:1, :]   # (1, 2C)
    bias = aux_ref[1:2, :]     # (1, 2C)
    out = (acc - mean * colsum) * inv_std + bias
    o_ref[...] = out.astype(o_ref.dtype)[:, :n_out]


def _chip_policy():
    """Static (trace-time) hardware policy: (vmem_budget_bytes, tensorcores_per_chip)."""
    vmem_cap = 128 << 20
    kind = ""
    try:
        info = pltpu.get_tpu_info()
        cap = getattr(info, "vmem_capacity_bytes", None)
        if cap:
            vmem_cap = int(cap)
    except Exception:
        pass
    try:
        kind = jax.devices()[0].device_kind.lower()
    except Exception:
        pass
    cores = 2 if "v7" in kind else 1
    if cores > 1 or vmem_cap <= (64 << 20):
        # 64 MiB part: leave headroom for compiler-internal scratch / double buffers.
        budget = min(vmem_cap, 64 << 20) - (12 << 20)
    else:
        # 128 MiB parts (v5e/v6e): allow well above the 16/32 MiB scoped default.
        budget = min(vmem_cap, 128 << 20) - (28 << 20)
    return max(budget, 24 << 20), cores


@functools.partial(jax.jit, static_argnames=("tile_tokens",))
def patch_merging(x, reduction_weight, norm_gamma, norm_beta, *, tile_tokens=None):
    """
    Args:
      x:                [..., H, W, C]   (f32 or bf16; bf16 streams straight into the MXU)
      reduction_weight: [2C, 4C]         nn.Linear(4C, 2C, bias=False) weight (out, in)
      norm_gamma:       [4C]             LayerNorm(4C) weight (use norm_skip's for skip=True)
      norm_beta:        [4C]             LayerNorm(4C) bias
      tile_tokens:      optional override for output tokens per grid block (auto by default)
    Returns:
      [..., ceil(H/2), ceil(W/2), 2C]
    """
    orig_dtype = x.dtype
    *lead, H, W, C = x.shape
    lead = tuple(lead)
    B = 1
    for d in lead:
        B *= d
    xb = x.reshape((B, H, W, C))

    # F.pad equivalent for odd spatial dims (one extra HBM pass only on the odd path).
    pad_h, pad_w = H % 2, W % 2
    if pad_h or pad_w:
        xb = jnp.pad(xb, ((0, 0), (0, pad_h), (0, pad_w), (0, 0)))
    Hp, Wp = H + pad_h, W + pad_w
    H2, W2 = Hp // 2, Wp // 2
    R = B * H2
    M = R * W2
    twoC = 2 * C
    out_dim = 2 * C

    # Copy-free (plain, row-major) reshape: [B, Hp, Wp, C] -> [B*H2, 2, W2, 2C].
    xr = xb.reshape((R, 2, W2, twoC))

    # --- fold LayerNorm affine + chunk permutation into the reduction weight (tiny XLA ops) ---
    f32 = jnp.float32
    Wt = reduction_weight.astype(f32).T                         # (4C, 2C)
    Wg = norm_gamma.astype(f32)[:, None] * Wt                   # gamma folded into W^T rows
    # PyTorch concat order is [x0, x1, x2, x3] = [(h0,w0), (h1,w0), (h0,w1), (h1,w1)].
    Wg_even = jnp.concatenate([Wg[0:C], Wg[2 * C:3 * C]], axis=0)    # rows for [x0 | x2]
    Wg_odd = jnp.concatenate([Wg[C:2 * C], Wg[3 * C:4 * C]], axis=0)  # rows for [x1 | x3]
    colsum = jnp.sum(Wg, axis=0, keepdims=True)                 # (1, 2C)
    bias = (norm_beta.astype(f32) @ Wt)[None, :]                # (1, 2C)
    aux = jnp.concatenate([colsum, bias], axis=0)               # (2, 2C) f32
    Wg_even = Wg_even.astype(orig_dtype)
    Wg_odd = Wg_odd.astype(orig_dtype)

    # --- generation-aware tile / grid / VMEM policy -------------------------------------
    isz = jnp.dtype(orig_dtype).itemsize
    vmem_budget, n_cores = _chip_policy()

    # Output blocks are (tile_r*W2, 2C); keep tile_r a multiple of g so tile_r*W2 % 8 == 0.
    g = 8 // math.gcd(W2, 8)

    # Per-r VMEM cost: double-buffered in/out blocks + f32 accumulator + f32 upcast temps.
    per_row = (2 * (2 * W2 * twoC * isz)
               + 2 * (W2 * out_dim * isz)
               + W2 * out_dim * 4
               + 2 * W2 * twoC * 4)
    resident = 4 * twoC * out_dim * isz + 2 * 2 * out_dim * 4   # weight halves + aux (x2 bufs)
    budget_rows = max(1, (vmem_budget - resident - (4 << 20)) // per_row)

    target_tokens = tile_tokens if tile_tokens is not None else (1024 if n_cores > 1 else 2048)
    target_rows = max(1, target_tokens // max(1, W2))

    tile_r = min(budget_rows, target_rows, R)
    if n_cores > 1:
        # v7x: keep >= 2 grid steps per TensorCore so per-core DMA/compute overlap survives.
        min_steps = 2 * n_cores
        if R >= min_steps * g:
            tile_r = min(tile_r, max(g, ((R // min_steps) // g) * g))
    if tile_r < R:
        tile_r = max(g, (tile_r // g) * g)   # sublane-aligned flattened output block
        tile_r = min(tile_r, R)
    tile_m = tile_r * W2 if tile_r < R else M   # full extent when single block
    grid_r = pl.cdiv(R, tile_r)

    need = (2 * tile_r * 2 * W2 * twoC * isz
            + 2 * tile_r * W2 * out_dim * isz
            + resident)
    vmem_limit = int(min(max(need + (8 << 20), 32 << 20), vmem_budget + (8 << 20)))

    out = pl.pallas_call(
        _patch_merging_kernel,
        out_shape=jax.ShapeDtypeStruct((M, out_dim), orig_dtype),
        grid_spec=pltpu.PrefetchScalarGridSpec(
            num_scalar_prefetch=0,
            grid=(grid_r,),
            in_specs=[
                pl.BlockSpec((tile_r, 2, W2, twoC), lambda i: (i, 0, 0, 0)),
                pl.BlockSpec((twoC, out_dim), lambda i: (0, 0)),
                pl.BlockSpec((twoC, out_dim), lambda i: (0, 0)),
                pl.BlockSpec((2, out_dim), lambda i: (0, 0)),
            ],
            out_specs=pl.BlockSpec((tile_m, out_dim), lambda i: (i, 0)),
        ),
        compiler_params=pltpu.CompilerParams(
            dimension_semantics=("parallel",),
            vmem_limit_bytes=vmem_limit),
    )(xr, Wg_even, Wg_odd, aux)

    # Copy-free reshape back to [..., H2, W2, 2C].
    return out.reshape(lead + (H2, W2, out_dim))


# ----------------------------- pure-JAX reference ------------------------------------
def _patch_merging_pad(x):
    H, W = x.shape[-3], x.shape[-2]
    x = jnp.pad(x, [(0, 0)] * (x.ndim - 3) + [(0, H % 2), (0, W % 2), (0, 0)])
    x0 = x[..., 0::2, 0::2, :]
    x1 = x[..., 1::2, 0::2, :]
    x2 = x[..., 0::2, 1::2, :]
    x3 = x[..., 1::2, 1::2, :]
    return jnp.concatenate([x0, x1, x2, x3], axis=-1)


def _reference(x, reduction_weight, norm_gamma, norm_beta):
    """Mirrors PatchMerging.forward (skip=False): pad/gather -> LayerNorm(4C) -> Linear."""
    t = _patch_merging_pad(x).astype(jnp.float32)
    mean = jnp.mean(t, axis=-1, keepdims=True)
    var = jnp.mean((t - mean) ** 2, axis=-1, keepdims=True)
    z = (t - mean) * jax.lax.rsqrt(var + EPS)
    z = z * norm_gamma.astype(jnp.float32) + norm_beta.astype(jnp.float32)
    return z @ reduction_weight.astype(jnp.float32).T


if __name__ == "__main__":
    key = jax.random.PRNGKey(0)
    kx, kw, kg, kb, kx2 = jax.random.split(key, 5)

    # Small shapes consistent with the module: dim C=32 -> reduction Linear(128, 64),
    # LayerNorm(128); spatial 16x16, batch 2.
    B, H, W, C = 2, 16, 16, 32
    x = jax.random.normal(kx, (B, H, W, C), dtype=jnp.float32)
    w_red = jax.random.normal(kw, (2 * C, 4 * C), dtype=jnp.float32) * 0.1
    gamma = 1.0 + 0.1 * jax.random.normal(kg, (4 * C,), dtype=jnp.float32)
    beta = 0.1 * jax.random.normal(kb, (4 * C,), dtype=jnp.float32)

    out = jax.block_until_ready(patch_merging(x, w_red, gamma, beta))
    assert out.shape == (B, H // 2, W // 2, 2 * C), out.shape
    ref = _reference(x, w_red, gamma, beta)
    err = float(jnp.max(jnp.abs(out - ref)))
    assert jnp.allclose(out, ref, atol=1e-3, rtol=1e-3), err

    # Odd spatial dims exercise the zero-pad path (F.pad equivalent).
    x2 = jax.random.normal(kx2, (1, 15, 15, C), dtype=jnp.float32)
    out2 = jax.block_until_ready(patch_merging(x2, w_red, gamma, beta))
    assert out2.shape == (1, 8, 8, 2 * C), out2.shape
    ref2 = _reference(x2, w_red, gamma, beta)
    err2 = float(jnp.max(jnp.abs(out2 - ref2)))
    assert jnp.allclose(out2, ref2, atol=1e-3, rtol=1e-3), err2

    # bf16 activations/weights stream straight into the MXU (f32 accumulation).
    xb16 = x.astype(jnp.bfloat16)
    outb = jax.block_until_ready(
        patch_merging(xb16, w_red.astype(jnp.bfloat16),
                      gamma.astype(jnp.bfloat16), beta.astype(jnp.bfloat16)))
    refb = _reference(xb16.astype(jnp.float32),
                      w_red.astype(jnp.bfloat16).astype(jnp.float32),
                      gamma.astype(jnp.bfloat16).astype(jnp.float32),
                      beta.astype(jnp.bfloat16).astype(jnp.float32))
    errb = float(jnp.max(jnp.abs(outb.astype(jnp.float32) - refb)))
    assert errb < 5e-2, errb

    print("KERNEL_OK")
</pallas_src>

<mosaic_0001>
module attributes {stable_mosaic.version = 11 : i64} {
  func.func @_patch_merging_kernel(%arg0: i32, %arg1: memref<16x2x8x64xf32, #tpu.memory_space<vmem>>, %arg2: memref<64x64xf32, #tpu.memory_space<vmem>>, %arg3: memref<64x64xf32, #tpu.memory_space<vmem>>, %arg4: memref<2x64xf32, #tpu.memory_space<vmem>>, %arg5: memref<128x64xf32, #tpu.memory_space<vmem>>) attributes {dimension_semantics = [#tpu.dimension_semantics<parallel>], iteration_bounds = array<i64: 1>, scalar_prefetch = 0 : i64, scratch_operands = 0 : i64, tpu.core_type = #tpu.core_type<tc>, window_params = [{transform_indices = @transform_0, window_bounds = array<i64: 16, 2, 8, 64>}, {pipeline_mode = #tpu.pipeline_mode<synchronous>, transform_indices = @transform_1, window_bounds = array<i64: 64, 64>}, {pipeline_mode = #tpu.pipeline_mode<synchronous>, transform_indices = @transform_2, window_bounds = array<i64: 64, 64>}, {pipeline_mode = #tpu.pipeline_mode<synchronous>, transform_indices = @transform_3, window_bounds = array<i64: 2, 64>}, {transform_indices = @transform_4, window_bounds = array<i64: 128, 64>}]} {
    %c0 = arith.constant 0 : index
    %c0_0 = arith.constant 0 : index
    %c0_1 = arith.constant 0 : index
    %c0_2 = arith.constant 0 : index
    %0 = vector.load %arg1[%c0, %c0_0, %c0_1, %c0_2] : memref<16x2x8x64xf32, #tpu.memory_space<vmem>>, vector<16x2x8x64xf32>
    %1 = vector.extract_strided_slice %0 {offsets = [0, 0, 0, 0], sizes = [16, 1, 8, 64], strides = [1, 1, 1, 1]} : vector<16x2x8x64xf32> to vector<16x1x8x64xf32>
    %2 = vector.shape_cast %1 : vector<16x1x8x64xf32> to vector<16x8x64xf32>
    %3 = vector.shape_cast %2 : vector<16x8x64xf32> to vector<128x64xf32>
    %4 = vector.extract_strided_slice %0 {offsets = [0, 1, 0, 0], sizes = [16, 1, 8, 64], strides = [1, 1, 1, 1]} : vector<16x2x8x64xf32> to vector<16x1x8x64xf32>
    %5 = vector.shape_cast %4 : vector<16x1x8x64xf32> to vector<16x8x64xf32>
    %6 = vector.shape_cast %5 : vector<16x8x64xf32> to vector<128x64xf32>
    %c0_3 = arith.constant 0 : index
    %c0_4 = arith.constant 0 : index
    %7 = vector.load %arg2[%c0_3, %c0_4] : memref<64x64xf32, #tpu.memory_space<vmem>>, vector<64x64xf32>
    %cst = arith.constant dense<0.000000e+00> : vector<128x64xf32>
    %8 = tpu.matmul %3, %7, %cst {dimension_numbers = #tpu.dot_dimension_numbers<[1], [0], [0], [1], [0, 0, 1, 1], [], []>} : vector<128x64xf32>, vector<64x64xf32>, vector<128x64xf32> -> vector<128x64xf32>
    %c0_5 = arith.constant 0 : index
    %c0_6 = arith.constant 0 : index
    %9 = vector.load %arg3[%c0_5, %c0_6] : memref<64x64xf32, #tpu.memory_space<vmem>>, vector<64x64xf32>
    %cst_7 = arith.constant dense<0.000000e+00> : vector<128x64xf32>
    %10 = tpu.matmul %6, %9, %cst_7 {dimension_numbers = #tpu.dot_dimension_numbers<[1], [0], [0], [1], [0, 0, 1, 1], [], []>} : vector<128x64xf32>, vector<64x64xf32>, vector<128x64xf32> -> vector<128x64xf32>
    %11 = arith.addf %8, %10 : vector<128x64xf32>
    %cst_8 = arith.constant dense<0.000000e+00> : vector<128xf32>
    %12 = vector.multi_reduction <add>, %3, %cst_8 [1] : vector<128x64xf32> to vector<128xf32>
    %13 = vector.shape_cast %12 : vector<128xf32> to vector<128x1xf32>
    %cst_9 = arith.constant dense<0.000000e+00> : vector<128xf32>
    %14 = vector.multi_reduction <add>, %6, %cst_9 [1] : vector<128x64xf32> to vector<128xf32>
    %15 = vector.shape_cast %14 : vector<128xf32> to vector<128x1xf32>
    %16 = arith.addf %13, %15 : vector<128x1xf32>
    %17 = arith.mulf %3, %3 : vector<128x64xf32>
    %cst_10 = arith.constant dense<0.000000e+00> : vector<128xf32>
    %18 = vector.multi_reduction <add>, %17, %cst_10 [1] : vector<128x64xf32> to vector<128xf32>
    %19 = vector.shape_cast %18 : vector<128xf32> to vector<128x1xf32>
    %20 = arith.mulf %6, %6 : vector<128x64xf32>
    %cst_11 = arith.constant dense<0.000000e+00> : vector<128xf32>
    %21 = vector.multi_reduction <add>, %20, %cst_11 [1] : vector<128x64xf32> to vector<128xf32>
    %22 = vector.shape_cast %21 : vector<128xf32> to vector<128x1xf32>
    %23 = arith.addf %19, %22 : vector<128x1xf32>
    %cst_12 = arith.constant 7.812500e-03 : f32
    %24 = vector.broadcast %cst_12 : f32 to vector<128x1xf32>
    %25 = arith.mulf %16, %24 : vector<128x1xf32>
    %cst_13 = arith.constant 7.812500e-03 : f32
    %26 = vector.broadcast %cst_13 : f32 to vector<128x1xf32>
    %27 = arith.mulf %23, %26 : vector<128x1xf32>
    %28 = arith.mulf %25, %25 : vector<128x1xf32>
    %29 = arith.subf %27, %28 : vector<128x1xf32>
    %cst_14 = arith.constant 0.000000e+00 : f32
    %30 = vector.broadcast %cst_14 : f32 to vector<128x1xf32>
    %31 = arith.maximumf %29, %30 : vector<128x1xf32>
    %cst_15 = arith.constant 9.99999974E-6 : f32
    %32 = vector.broadcast %cst_15 : f32 to vector<128x1xf32>
    %33 = arith.addf %31, %32 : vector<128x1xf32>
    %34 = math.rsqrt %33 : vector<128x1xf32>
    %c0_16 = arith.constant 0 : index
    %c0_17 = arith.constant 0 : index
    %35 = vector.load %arg4[%c0_16, %c0_17] : memref<2x64xf32, #tpu.memory_space<vmem>>, vector<1x64xf32>
    %c1 = arith.constant 1 : index
    %c0_18 = arith.constant 0 : index
    %36 = vector.load %arg4[%c1, %c0_18] : memref<2x64xf32, #tpu.memory_space<vmem>>, vector<1x64xf32>
    %37 = vector.broadcast %25 : vector<128x1xf32> to vector<128x64xf32>
    %38 = vector.broadcast %35 : vector<1x64xf32> to vector<128x64xf32>
    %39 = arith.mulf %37, %38 : vector<128x64xf32>
    %40 = arith.subf %11, %39 : vector<128x64xf32>
    %41 = vector.broadcast %34 : vector<128x1xf32> to vector<128x64xf32>
    %42 = arith.mulf %40, %41 : vector<128x64xf32>
    %43 = vector.broadcast %36 : vector<1x64xf32> to vector<128x64xf32>
    %44 = arith.addf %42, %43 : vector<128x64xf32>
    %c0_19 = arith.constant 0 : index
    %c0_20 = arith.constant 0 : index
    %45 = vector.load %arg5[%c0_19, %c0_20] : memref<128x64xf32, #tpu.memory_space<vmem>>, vector<128x64xf32>
    tpu.vector_store %arg5[%c0_19, %c0_20], %44 {strides = array<i32>} : memref<128x64xf32, #tpu.memory_space<vmem>>, vector<128x64xf32>,
    return
  }
  func.func @transform_0(%arg0: i32) -> (i32, i32, i32, i32) {
    %c0_i32 = arith.constant 0 : i32
    %c0_i32_0 = arith.constant 0 : i32
    %c0_i32_1 = arith.constant 0 : i32
    %c0_i32_2 = arith.constant 0 : i32
    return %arg0, %c0_i32, %c0_i32_0, %c0_i32_1 : i32, i32, i32, i32
  }
  func.func @transform_1(%arg0: i32) -> (i32, i32) {
    %c0_i32 = arith.constant 0 : i32
    %c0_i32_0 = arith.constant 0 : i32
    %c0_i32_1 = arith.constant 0 : i32
    return %c0_i32, %c0_i32_0 : i32, i32
  }
  func.func @transform_2(%arg0: i32) -> (i32, i32) {
    %c0_i32 = arith.constant 0 : i32
    %c0_i32_0 = arith.constant 0 : i32
    %c0_i32_1 = arith.constant 0 : i32
    return %c0_i32, %c0_i32_0 : i32, i32
  }
  func.func @transform_3(%arg0: i32) -> (i32, i32) {
    %c0_i32 = arith.constant 0 : i32
    %c0_i32_0 = arith.constant 0 : i32
    %c0_i32_1 = arith.constant 0 : i32
    return %c0_i32, %c0_i32_0 : i32, i32
  }
  func.func @transform_4(%arg0: i32) -> (i32, i32) {
    %c0_i32 = arith.constant 0 : i32
    %c0_i32_0 = arith.constant 0 : i32
    return %arg0, %c0_i32 : i32, i32
  }
}

</mosaic_0001>

<llo_original>
// kernel: patch_merging.1
$region0: #{patch_merging.1}
  #allocation0 [shape = 'u32[]', space=smem, size = 0x4, offset = 0x4, fixed_abs, tag = 'smem constant byte address 0x4 - core index']
  #allocation1 [shape = 'u32[144,128]{1,0:T(1,128)}', space=vmem, size = 0x12000, scoped, tag = 'internal scratch']
  %s0 = inlined_call_operand.vmem [shape: f32[16,2,8,64], index: 0, kind: input, shape index: {}]
  %s1 = inlined_call_operand.vmem [shape: f32[64,64], index: 1, kind: input, shape index: {}]
  %s2 = inlined_call_operand.vmem [shape: f32[64,64], index: 2, kind: input, shape index: {}]
  %s3 = inlined_call_operand.vmem [shape: f32[2,64], index: 3, kind: input, shape index: {}]
  %s4 = inlined_call_operand.hbm [shape: f32[128,64], index: 4, kind: output, shape index: {}]
  %s5 = sld [smem:[#allocation0]]
  $region26: #{patch_merging.1} parent=0
    _
  %s7 = ssub.s32 1, %s5
  %s8 = scalar_select 0, %s7, %s5
  $region1: #{patch_merging.1} parent=0
    #allocation2 [shape = 'u8[65536]{0}', space=vmem, size = 0x10000, scoped, tag = 'output window, operand 0, single buffered']
    #allocation3 [shape = 's32[1]{0}', space=sflag, size = 0x4, scoped, tag = 'scoped memory for patch_merging.1']
    %9 = vsyncpa [#allocation3], 0
    // Predicated region
    $region2: #{patch_merging.1} parent=1 // pred_check
      _
    $region3: #{patch_merging.1} parent=1 // pred_check_branch
      %11 = sbr.rel (0) target = $region5
    $region4: #{patch_merging.1} parent=1 // pred_region
      _
    $region5: #{patch_merging.1} parent=1 // pred_fallthru
      _
    // Predicated region
    $region6: #{patch_merging.1} parent=1 // pred_check
      _
    $region7: #{patch_merging.1} parent=1 // pred_check_branch
      %13 = sbr.rel (0) target = $region9
    $region8: #{patch_merging.1} parent=1 // pred_region
      _
    $region9: #{patch_merging.1} parent=1 // pred_fallthru
      _
    // Predicated region
    $region10: #{patch_merging.1} parent=1 // pred_check
      _
    $region11: #{patch_merging.1} parent=1 // pred_check_branch
      %15 = sbr.rel (0) target = $region13
    $region12: #{patch_merging.1} parent=1 // pred_region
      _
    $region13: #{patch_merging.1} parent=1 // pred_fallthru
      _
    // Predicated region
    $region14: #{patch_merging.1} parent=1 // pred_check
      _
    $region15: #{patch_merging.1} parent=1 // pred_check_branch
      %17 = sbr.rel (0) target = $region17
    $region16: #{patch_merging.1} parent=1 // pred_region
      _
    $region17: #{patch_merging.1} parent=1 // pred_fallthru
      _
    %v18 = vld [vmem:[%s0] sm:$0xff]
    %v19 = vld [vmem:[%s0 + $0x8] sm:$0xff]
    %v20 = vld [vmem:[%s0 + $0x10] sm:$0xff]
    %v21 = vld [vmem:[%s0 + $0x18] sm:$0xff]
    %v22 = vld [vmem:[%s0 + $0x20] sm:$0xff]
    %v23 = vld [vmem:[%s0 + $0x28] sm:$0xff]
    %v24 = vld [vmem:[%s0 + $0x30] sm:$0xff]
    %v25 = vld [vmem:[%s0 + $0x38] sm:$0xff]
    %v26 = vld [vmem:[%s0 + $0x40] sm:$0xff]
    %v27 = vld [vmem:[%s0 + $0x48] sm:$0xff]
    %v28 = vld [vmem:[%s0 + $0x50] sm:$0xff]
    %v29 = vld [vmem:[%s0 + $0x58] sm:$0xff]
    %v30 = vld [vmem:[%s0 + $0x60] sm:$0xff]
    %v31 = vld [vmem:[%s0 + $0x68] sm:$0xff]
    %v32 = vld [vmem:[%s0 + $0x70] sm:$0xff]
    %v33 = vld [vmem:[%s0 + $0x78] sm:$0xff]
    %v34 = vld [vmem:[%s0 + $0x80] sm:$0xff]
    %v35 = vld [vmem:[%s0 + $0x88] sm:$0xff]
    %v36 = vld [vmem:[%s0 + $0x90] sm:$0xff]
    %v37 = vld [vmem:[%s0 + $0x98] sm:$0xff]
    %v38 = vld [vmem:[%s0 + $0xa0] sm:$0xff]
    %v39 = vld [vmem:[%s0 + $0xa8] sm:$0xff]
    %v40 = vld [vmem:[%s0 + $0xb0] sm:$0xff]
    %v41 = vld [vmem:[%s0 + $0xb8] sm:$0xff]
    %v42 = vld [vmem:[%s0 + $0xc0] sm:$0xff]
    %v43 = vld [vmem:[%s0 + $0xc8] sm:$0xff]
    %v44 = vld [vmem:[%s0 + $0xd0] sm:$0xff]
    %v45 = vld [vmem:[%s0 + $0xd8] sm:$0xff]
    %v46 = vld [vmem:[%s0 + $0xe0] sm:$0xff]
    %v47 = vld [vmem:[%s0 + $0xe8] sm:$0xff]
    %v48 = vld [vmem:[%s0 + $0xf0] sm:$0xff]
    %v49 = vld [vmem:[%s0 + $0xf8] sm:$0xff]
    %v50 = vld [vmem:[%s1] sm:$0xff]
    %v51 = vld [vmem:[%s1 + $0x8] sm:$0xff]
    %v52 = vld [vmem:[%s1 + $0x10] sm:$0xff]
    %v53 = vld [vmem:[%s1 + $0x18] sm:$0xff]
    %v54 = vld [vmem:[%s1 + $0x20] sm:$0xff]
    %v55 = vld [vmem:[%s1 + $0x28] sm:$0xff]
    %v56 = vld [vmem:[%s1 + $0x30] sm:$0xff]
    %v57 = vld [vmem:[%s1 + $0x38] sm:$0xff]
    %v58 = vld [vmem:[%s2] sm:$0xff]
    %v59 = vld [vmem:[%s2 + $0x8] sm:$0xff]
    %v60 = vld [vmem:[%s2 + $0x10] sm:$0xff]
    %v61 = vld [vmem:[%s2 + $0x18] sm:$0xff]
    %v62 = vld [vmem:[%s2 + $0x20] sm:$0xff]
    %v63 = vld [vmem:[%s2 + $0x28] sm:$0xff]
    %v64 = vld [vmem:[%s2 + $0x30] sm:$0xff]
    %v65 = vld [vmem:[%s2 + $0x38] sm:$0xff]
    %vm66 = vcmask 523264
    %v68 = vsel %vm66, %v19, 0
    %v71 = vsel %vm66, %v21, 0
    %v74 = vsel %vm66, %v23, 0
    %v77 = vsel %vm66, %v25, 0
    %v80 = vsel %vm66, %v27, 0
    %v83 = vsel %vm66, %v29, 0
    %v86 = vsel %vm66, %v31, 0
    %v89 = vsel %vm66, %v33, 0
    %v92 = vsel %vm66, %v35, 0
    %v95 = vsel %vm66, %v37, 0
    %v98 = vsel %vm66, %v39, 0
    %v101 = vsel %vm66, %v41, 0
    %v104 = vsel %vm66, %v43, 0
    %v107 = vsel %vm66, %v45, 0
    %v110 = vsel %vm66, %v47, 0
    %v113 = vsel %vm66, %v49, 0
    %115 = vmatprep.subr.mxu0 0.0
    %116 = vmatpush1.msra.mxu0 0.0
    %117 = vmatprep.subr.mxu0 0.0
    %118 = vmatpush1.msra.mxu0 0.0
    %119 = vmatprep.subr.mxu0 0.0
    %120 = vmatpush1.msra.mxu0 0.0
    %121 = vmatprep.subr.mxu0 0.0
    %122 = vmatpush1.msra.mxu0 0.0
    %123 = vmatprep.subr.mxu0 0.0
    %124 = vmatpush1.msra.mxu0 0.0
    %125 = vmatprep.subr.mxu0 0.0
    %126 = vmatpush1.msra.mxu0 0.0
    %127 = vmatprep.subr.mxu0 0.0
    %128 = vmatpush1.msra.mxu0 0.0
    %129 = vmatprep.subr.mxu0 0.0
    %130 = vmatpush1.msra.mxu0 0.0
    %131 = vmatprep.subr.mxu0 0.0
    %132 = vmatpush1.msra.mxu0 %v65
    %133 = vmatprep.subr.mxu0 0.0
    %134 = vmatpush1.msra.mxu0 %v64
    %135 = vmatprep.subr.mxu0 0.0
    %136 = vmatpush1.msra.mxu0 %v63
    %137 = vmatprep.subr.mxu0 0.0
    %138 = vmatpush1.msra.mxu0 %v62
    %139 = vmatprep.subr.mxu0 0.0
    %140 = vmatpush1.msra.mxu0 %v61
    %141 = vmatprep.subr.mxu0 0.0
    %142 = vmatpush1.msra.mxu0 %v60
    %143 = vmatprep.subr.mxu0 0.0
    %144 = vmatpush1.msra.mxu0 %v59
    %145 = vmatprep.subr.mxu0 0.0
    %146 = vmatpush1.msra.mxu0 %v58
    %147 = vmatprep.subr.mxu0 0.0
    %148 = vmatpush2.msra.mxu0 0.0
    %149 = vmatprep.subr.mxu0 0.0
    %150 = vmatpush2.msra.mxu0 0.0
    %151 = vmatprep.subr.mxu0 0.0
    %152 = vmatpush2.msra.mxu0 0.0
    %153 = vmatprep.subr.mxu0 0.0
    %154 = vmatpush2.msra.mxu0 0.0
    %155 = vmatprep.subr.mxu0 0.0
    %156 = vmatpush2.msra.mxu0 0.0
    %157 = vmatprep.subr.mxu0 0.0
    %158 = vmatpush2.msra.mxu0 0.0
    %159 = vmatprep.subr.mxu0 0.0
    %160 = vmatpush2.msra.mxu0 0.0
    %161 = vmatprep.subr.mxu0 0.0
    %162 = vmatpush2.msra.mxu0 0.0
    %163 = vmatprep.subr.mxu0 0.0
    %164 = vmatpush2.msra.mxu0 0.0
    %165 = vmatprep.subr.mxu0 0.0
    %166 = vmatpush2.msra.mxu0 0.0
    %167 = vmatprep.subr.mxu0 0.0
    %168 = vmatpush2.msra.mxu0 0.0
    %169 = vmatprep.subr.mxu0 0.0
    %170 = vmatpush2.msra.mxu0 0.0
    %171 = vmatprep.subr.mxu0 0.0
    %172 = vmatpush2.msra.mxu0 0.0
    %173 = vmatprep.subr.mxu0 0.0
    %174 = vmatpush2.msra.mxu0 0.0
    %175 = vmatprep.subr.mxu0 0.0
    %176 = vmatpush2.msra.mxu0 0.0
    %177 = vmatprep.subr.mxu0 0.0
    %178 = vmatpush2.msra.mxu0 0.0
    %179 = vmatprep.mubr.f32.mxu0 0.0
    %180 = vmatmul.mubr.f32.gmra.mxu0 %v68
    %v181 = vpop.f32.mrf.mxu0
    %v182 = vadd.f32 0.0, %v181
    %v183 = vpop.f32.mrf.mxu0
    %184 = vmatprep.mubr.f32.mxu0 0.0
    %185 = vmatmul.mubr.f32.gmra.mxu0 %v71
    %v186 = vpop.f32.mrf.mxu0
    %v187 = vadd.f32 0.0, %v186
    %v188 = vpop.f32.mrf.mxu0
    %189 = vmatprep.mubr.f32.mxu0 0.0
    %190 = vmatmul.mubr.f32.gmra.mxu0 %v74
    %v191 = vpop.f32.mrf.mxu0
    %v192 = vadd.f32 0.0, %v191
    %v193 = vpop.f32.mrf.mxu0
    %194 = vmatprep.mubr.f32.mxu0 0.0
    %195 = vmatmul.mubr.f32.gmra.mxu0 %v77
    %v196 = vpop.f32.mrf.mxu0
    %v197 = vadd.f32 0.0, %v196
    %v198 = vpop.f32.mrf.mxu0
    %199 = vmatprep.mubr.f32.mxu0 0.0
    %200 = vmatmul.mubr.f32.gmra.mxu0 %v80
    %v201 = vpop.f32.mrf.mxu0
    %v202 = vadd.f32 0.0, %v201
    %v203 = vpop.f32.mrf.mxu0
    %204 = vmatprep.mubr.f32.mxu0 0.0
    %205 = vmatmul.mubr.f32.gmra.mxu0 %v83
    %v206 = vpop.f32.mrf.mxu0
    %v207 = vadd.f32 0.0, %v206
    %v208 = vpop.f32.mrf.mxu0
    %209 = vmatprep.mubr.f32.mxu0 0.0
    %210 = vmatmul.mubr.f32.gmra.mxu0 %v86
    %v211 = vpop.f32.mrf.mxu0
    %v212 = vadd.f32 0.0, %v211
    %v213 = vpop.f32.mrf.mxu0
    %214 = vmatprep.mubr.f32.mxu0 0.0
    %215 = vmatmul.mubr.f32.gmra.mxu0 %v89
    %v216 = vpop.f32.mrf.mxu0
    %v217 = vadd.f32 0.0, %v216
    %v218 = vpop.f32.mrf.mxu0
    %219 = vmatprep.mubr.f32.mxu0 0.0
    %220 = vmatmul.mubr.f32.gmra.mxu0 %v92
    %v221 = vpop.f32.mrf.mxu0
    %v222 = vadd.f32 0.0, %v221
    %v223 = vpop.f32.mrf.mxu0
    %224 = vmatprep.mubr.f32.mxu0 0.0
    %225 = vmatmul.mubr.f32.gmra.mxu0 %v95
    %v226 = vpop.f32.mrf.mxu0
    %v227 = vadd.f32 0.0, %v226
    %v228 = vpop.f32.mrf.mxu0
    %229 = vmatprep.mubr.f32.mxu0 0.0
    %230 = vmatmul.mubr.f32.gmra.mxu0 %v98
    %v231 = vpop.f32.mrf.mxu0
    %v232 = vadd.f32 0.0, %v231
    %v233 = vpop.f32.mrf.mxu0
    %234 = vmatprep.mubr.f32.mxu0 0.0
    %235 = vmatmul.mubr.f32.gmra.mxu0 %v101
    %v236 = vpop.f32.mrf.mxu0
    %v237 = vadd.f32 0.0, %v236
    %v238 = vpop.f32.mrf.mxu0
    %239 = vmatprep.mubr.f32.mxu0 0.0
    %240 = vmatmul.mubr.f32.gmra.mxu0 %v104
    %v241 = vpop.f32.mrf.mxu0
    %v242 = vadd.f32 0.0, %v241
    %v243 = vpop.f32.mrf.mxu0
    %244 = vmatprep.mubr.f32.mxu0 0.0
    %245 = vmatmul.mubr.f32.gmra.mxu0 %v107
    %v246 = vpop.f32.mrf.mxu0
    %v247 = vadd.f32 0.0, %v246
    %v248 = vpop.f32.mrf.mxu0
    %249 = vmatprep.mubr.f32.mxu0 0.0
    %250 = vmatmul.mubr.f32.gmra.mxu0 %v110
    %v251 = vpop.f32.mrf.mxu0
    %v252 = vadd.f32 0.0, %v251
    %v253 = vpop.f32.mrf.mxu0
    %254 = vmatprep.mubr.f32.mxu0 0.0
    %255 = vmatmul.mubr.f32.gmra.mxu0 %v113
    %v256 = vpop.f32.mrf.mxu0
    %v257 = vadd.f32 0.0, %v256
    %v258 = vpop.f32.mrf.mxu0
    %259 = vdwg.mxu0
    %v261 = vsel %vm66, %v18, 0
    %v264 = vsel %vm66, %v20, 0
    %v267 = vsel %vm66, %v22, 0
    %v270 = vsel %vm66, %v24, 0
    %v273 = vsel %vm66, %v26, 0
    %v276 = vsel %vm66, %v28, 0
    %v279 = vsel %vm66, %v30, 0
    %v282 = vsel %vm66, %v32, 0
    %v285 = vsel %vm66, %v34, 0
    %v288 = vsel %vm66, %v36, 0
    %v291 = vsel %vm66, %v38, 0
    %v294 = vsel %vm66, %v40, 0
    %v297 = vsel %vm66, %v42, 0
    %v300 = vsel %vm66, %v44, 0
    %v303 = vsel %vm66, %v46, 0
    %v306 = vsel %vm66, %v48, 0
    %308 = vmatprep.subr.mxu0 0.0
    %309 = vmatpush1.msra.mxu0 0.0
    %310 = vmatprep.subr.mxu0 0.0
    %311 = vmatpush1.msra.mxu0 0.0
    %312 = vmatprep.subr.mxu0 0.0
    %313 = vmatpush1.msra.mxu0 0.0
    %314 = vmatprep.subr.mxu0 0.0
    %315 = vmatpush1.msra.mxu0 0.0
    %316 = vmatprep.subr.mxu0 0.0
    %317 = vmatpush1.msra.mxu0 0.0
    %318 = vmatprep.subr.mxu0 0.0
    %319 = vmatpush1.msra.mxu0 0.0
    %320 = vmatprep.subr.mxu0 0.0
    %321 = vmatpush1.msra.mxu0 0.0
    %322 = vmatprep.subr.mxu0 0.0
    %323 = vmatpush1.msra.mxu0 0.0
    %324 = vmatprep.subr.mxu0 0.0
    %325 = vmatpush1.msra.mxu0 %v57
    %326 = vmatprep.subr.mxu0 0.0
    %327 = vmatpush1.msra.mxu0 %v56
    %328 = vmatprep.subr.mxu0 0.0
    %329 = vmatpush1.msra.mxu0 %v55
    %330 = vmatprep.subr.mxu0 0.0
    %331 = vmatpush1.msra.mxu0 %v54
    %332 = vmatprep.subr.mxu0 0.0
    %333 = vmatpush1.msra.mxu0 %v53
    %334 = vmatprep.subr.mxu0 0.0
    %335 = vmatpush1.msra.mxu0 %v52
    %336 = vmatprep.subr.mxu0 0.0
    %337 = vmatpush1.msra.mxu0 %v51
    %338 = vmatprep.subr.mxu0 0.0
    %339 = vmatpush1.msra.mxu0 %v50
    %340 = vmatprep.subr.mxu0 0.0
    %341 = vmatpush2.msra.mxu0 0.0
    %342 = vmatprep.subr.mxu0 0.0
    %343 = vmatpush2.msra.mxu0 0.0
    %344 = vmatprep.subr.mxu0 0.0
    %345 = vmatpush2.msra.mxu0 0.0
    %346 = vmatprep.subr.mxu0 0.0
    %347 = vmatpush2.msra.mxu0 0.0
    %348 = vmatprep.subr.mxu0 0.0
    %349 = vmatpush2.msra.mxu0 0.0
    %350 = vmatprep.subr.mxu0 0.0
    %351 = vmatpush2.msra.mxu0 0.0
    %352 = vmatprep.subr.mxu0 0.0
    %353 = vmatpush2.msra.mxu0 0.0
    %354 = vmatprep.subr.mxu0 0.0
    %355 = vmatpush2.msra.mxu0 0.0
    %356 = vmatprep.subr.mxu0 0.0
    %357 = vmatpush2.msra.mxu0 0.0
    %358 = vmatprep.subr.mxu0 0.0
    %359 = vmatpush2.msra.mxu0 0.0
    %360 = vmatprep.subr.mxu0 0.0
    %361 = vmatpush2.msra.mxu0 0.0
    %362 = vmatprep.subr.mxu0 0.0
    %363 = vmatpush2.msra.mxu0 0.0
    %364 = vmatprep.subr.mxu0 0.0
    %365 = vmatpush2.msra.mxu0 0.0
    %366 = vmatprep.subr.mxu0 0.0
    %367 = vmatpush2.msra.mxu0 0.0
    %368 = vmatprep.subr.mxu0 0.0
    %369 = vmatpush2.msra.mxu0 0.0
    %370 = vmatprep.subr.mxu0 0.0
    %371 = vmatpush2.msra.mxu0 0.0
    %372 = vmatprep.mubr.f32.mxu0 0.0
    %373 = vmatmul.mubr.f32.gmra.mxu0 %v261
    %v374 = vpop.f32.mrf.mxu0
    %v375 = vadd.f32 %v182, %v374
    %v376 = vpop.f32.mrf.mxu0
    %377 = vmatprep.mubr.f32.mxu0 0.0
    %378 = vmatmul.mubr.f32.gmra.mxu0 %v264
    %v379 = vpop.f32.mrf.mxu0
    %v380 = vadd.f32 %v187, %v379
    %v381 = vpop.f32.mrf.mxu0
    %382 = vmatprep.mubr.f32.mxu0 0.0
    %383 = vmatmul.mubr.f32.gmra.mxu0 %v267
    %v384 = vpop.f32.mrf.mxu0
    %v385 = vadd.f32 %v192, %v384
    %v386 = vpop.f32.mrf.mxu0
    %387 = vmatprep.mubr.f32.mxu0 0.0
    %388 = vmatmul.mubr.f32.gmra.mxu0 %v270
    %v389 = vpop.f32.mrf.mxu0
    %v390 = vadd.f32 %v197, %v389
    %v391 = vpop.f32.mrf.mxu0
    %392 = vmatprep.mubr.f32.mxu0 0.0
    %393 = vmatmul.mubr.f32.gmra.mxu0 %v273
    %v394 = vpop.f32.mrf.mxu0
    %v395 = vadd.f32 %v202, %v394
    %v396 = vpop.f32.mrf.mxu0
    %397 = vmatprep.mubr.f32.mxu0 0.0
    %398 = vmatmul.mubr.f32.gmra.mxu0 %v276
    %v399 = vpop.f32.mrf.mxu0
    %v400 = vadd.f32 %v207, %v399
    %v401 = vpop.f32.mrf.mxu0
    %402 = vmatprep.mubr.f32.mxu0 0.0
    %403 = vmatmul.mubr.f32.gmra.mxu0 %v279
    %v404 = vpop.f32.mrf.mxu0
    %v405 = vadd.f32 %v212, %v404
    %v406 = vpop.f32.mrf.mxu0
    %407 = vmatprep.mubr.f32.mxu0 0.0
    %408 = vmatmul.mubr.f32.gmra.mxu0 %v282
    %v409 = vpop.f32.mrf.mxu0
    %v410 = vadd.f32 %v217, %v409
    %v411 = vpop.f32.mrf.mxu0
    %412 = vmatprep.mubr.f32.mxu0 0.0
    %413 = vmatmul.mubr.f32.gmra.mxu0 %v285
    %v414 = vpop.f32.mrf.mxu0
    %v415 = vadd.f32 %v222, %v414
    %v416 = vpop.f32.mrf.mxu0
    %417 = vmatprep.mubr.f32.mxu0 0.0
    %418 = vmatmul.mubr.f32.gmra.mxu0 %v288
    %v419 = vpop.f32.mrf.mxu0
    %v420 = vadd.f32 %v227, %v419
    %v421 = vpop.f32.mrf.mxu0
    %422 = vmatprep.mubr.f32.mxu0 0.0
    %423 = vmatmul.mubr.f32.gmra.mxu0 %v291
    %v424 = vpop.f32.mrf.mxu0
    %v425 = vadd.f32 %v232, %v424
    %v426 = vpop.f32.mrf.mxu0
    %427 = vmatprep.mubr.f32.mxu0 0.0
    %428 = vmatmul.mubr.f32.gmra.mxu0 %v294
    %v429 = vpop.f32.mrf.mxu0
    %v430 = vadd.f32 %v237, %v429
    %v431 = vpop.f32.mrf.mxu0
    %432 = vmatprep.mubr.f32.mxu0 0.0
    %433 = vmatmul.mubr.f32.gmra.mxu0 %v297
    %v434 = vpop.f32.mrf.mxu0
    %v435 = vadd.f32 %v242, %v434
    %v436 = vpop.f32.mrf.mxu0
    %437 = vmatprep.mubr.f32.mxu0 0.0
    %438 = vmatmul.mubr.f32.gmra.mxu0 %v300
    %v439 = vpop.f32.mrf.mxu0
    %v440 = vadd.f32 %v247, %v439
    %v441 = vpop.f32.mrf.mxu0
    %442 = vmatprep.mubr.f32.mxu0 0.0
    %443 = vmatmul.mubr.f32.gmra.mxu0 %v303
    %v444 = vpop.f32.mrf.mxu0
    %v445 = vadd.f32 %v252, %v444
    %v446 = vpop.f32.mrf.mxu0
    %447 = vmatprep.mubr.f32.mxu0 0.0
    %448 = vmatmul.mubr.f32.gmra.mxu0 %v306
    %v449 = vpop.f32.mrf.mxu0
    %v450 = vadd.f32 %v257, %v449
    %v451 = vpop.f32.mrf.mxu0
    %452 = vdwg.mxu0
    %v453 = vsel %vm66, %v18, 0.0
    %454 = vadd.xlane.f32.xlu0 %v453
    %v455 = vpop.xlane.xlu0 %454
    %v456 = vsel %vm66, %v20, 0.0
    %457 = vadd.xlane.f32.xlu0 %v456
    %v458 = vpop.xlane.xlu0 %457
    %v459 = vsel %vm66, %v22, 0.0
    %460 = vadd.xlane.f32.xlu0 %v459
    %v461 = vpop.xlane.xlu0 %460
    %v462 = vsel %vm66, %v24, 0.0
    %463 = vadd.xlane.f32.xlu0 %v462
    %v464 = vpop.xlane.xlu0 %463
    %v465 = vsel %vm66, %v26, 0.0
    %466 = vadd.xlane.f32.xlu0 %v465
    %v467 = vpop.xlane.xlu0 %466
    %v468 = vsel %vm66, %v28, 0.0
    %469 = vadd.xlane.f32.xlu0 %v468
    %v470 = vpop.xlane.xlu0 %469
    %v471 = vsel %vm66, %v30, 0.0
    %472 = vadd.xlane.f32.xlu0 %v471
    %v473 = vpop.xlane.xlu0 %472
    %v474 = vsel %vm66, %v32, 0.0
    %475 = vadd.xlane.f32.xlu0 %v474
    %v476 = vpop.xlane.xlu0 %475
    %v477 = vsel %vm66, %v34, 0.0
    %478 = vadd.xlane.f32.xlu0 %v477
    %v479 = vpop.xlane.xlu0 %478
    %v480 = vsel %vm66, %v36, 0.0
    %481 = vadd.xlane.f32.xlu0 %v480
    %v482 = vpop.xlane.xlu0 %481
    %v483 = vsel %vm66, %v38, 0.0
    %484 = vadd.xlane.f32.xlu0 %v483
    %v485 = vpop.xlane.xlu0 %484
    %v486 = vsel %vm66, %v40, 0.0
    %487 = vadd.xlane.f32.xlu0 %v486
    %v488 = vpop.xlane.xlu0 %487
    %v489 = vsel %vm66, %v42, 0.0
    %490 = vadd.xlane.f32.xlu0 %v489
    %v491 = vpop.xlane.xlu0 %490
    %v492 = vsel %vm66, %v44, 0.0
    %493 = vadd.xlane.f32.xlu0 %v492
    %v494 = vpop.xlane.xlu0 %493
    %v495 = vsel %vm66, %v46, 0.0
    %496 = vadd.xlane.f32.xlu0 %v495
    %v497 = vpop.xlane.xlu0 %496
    %v498 = vsel %vm66, %v48, 0.0
    %499 = vadd.xlane.f32.xlu0 %v498
    %v500 = vpop.xlane.xlu0 %499
    %v501 = vsel %vm66, %v19, 0.0
    %502 = vadd.xlane.f32.xlu0 %v501
    %v503 = vpop.xlane.xlu0 %502
    %v504 = vsel %vm66, %v21, 0.0
    %505 = vadd.xlane.f32.xlu0 %v504
    %v506 = vpop.xlane.xlu0 %505
    %v507 = vsel %vm66, %v23, 0.0
    %508 = vadd.xlane.f32.xlu0 %v507
    %v509 = vpop.xlane.xlu0 %508
    %v510 = vsel %vm66, %v25, 0.0
    %511 = vadd.xlane.f32.xlu0 %v510
    %v512 = vpop.xlane.xlu0 %511
    %v513 = vsel %vm66, %v27, 0.0
    %514 = vadd.xlane.f32.xlu0 %v513
    %v515 = vpop.xlane.xlu0 %514
    %v516 = vsel %vm66, %v29, 0.0
    %517 = vadd.xlane.f32.xlu0 %v516
    %v518 = vpop.xlane.xlu0 %517
    %v519 = vsel %vm66, %v31, 0.0
    %520 = vadd.xlane.f32.xlu0 %v519
    %v521 = vpop.xlane.xlu0 %520
    %v522 = vsel %vm66, %v33, 0.0
    %523 = vadd.xlane.f32.xlu0 %v522
    %v524 = vpop.xlane.xlu0 %523
    %v525 = vsel %vm66, %v35, 0.0
    %526 = vadd.xlane.f32.xlu0 %v525
    %v527 = vpop.xlane.xlu0 %526
    %v528 = vsel %vm66, %v37, 0.0
    %529 = vadd.xlane.f32.xlu0 %v528
    %v530 = vpop.xlane.xlu0 %529
    %v531 = vsel %vm66, %v39, 0.0
    %532 = vadd.xlane.f32.xlu0 %v531
    %v533 = vpop.xlane.xlu0 %532
    %v534 = vsel %vm66, %v41, 0.0
    %535 = vadd.xlane.f32.xlu0 %v534
    %v536 = vpop.xlane.xlu0 %535
    %v537 = vsel %vm66, %v43, 0.0
    %538 = vadd.xlane.f32.xlu0 %v537
    %v539 = vpop.xlane.xlu0 %538
    %v540 = vsel %vm66, %v45, 0.0
    %541 = vadd.xlane.f32.xlu0 %v540
    %v542 = vpop.xlane.xlu0 %541
    %v543 = vsel %vm66, %v47, 0.0
    %544 = vadd.xlane.f32.xlu0 %v543
    %v545 = vpop.xlane.xlu0 %544
    %v546 = vsel %vm66, %v49, 0.0
    %547 = vadd.xlane.f32.xlu0 %v546
    %v548 = vpop.xlane.xlu0 %547
    %v549 = vadd.f32 %v455, %v503
    %v550 = vadd.f32 %v458, %v506
    %v551 = vadd.f32 %v461, %v509
    %v552 = vadd.f32 %v464, %v512
    %v553 = vadd.f32 %v467, %v515
    %v554 = vadd.f32 %v470, %v518
    %v555 = vadd.f32 %v473, %v521
    %v556 = vadd.f32 %v476, %v524
    %v557 = vadd.f32 %v479, %v527
    %v558 = vadd.f32 %v482, %v530
    %v559 = vadd.f32 %v485, %v533
    %v560 = vadd.f32 %v488, %v536
    %v561 = vadd.f32 %v491, %v539
    %v562 = vadd.f32 %v494, %v542
    %v563 = vadd.f32 %v497, %v545
    %v564 = vadd.f32 %v500, %v548
    %v565 = vmul.f32 %v18, %v18
    %v566 = vmul.f32 %v20, %v20
    %v567 = vmul.f32 %v22, %v22
    %v568 = vmul.f32 %v24, %v24
    %v569 = vmul.f32 %v26, %v26
    %v570 = vmul.f32 %v28, %v28
    %v571 = vmul.f32 %v30, %v30
    %v572 = vmul.f32 %v32, %v32
    %v573 = vmul.f32 %v34, %v34
    %v574 = vmul.f32 %v36, %v36
    %v575 = vmul.f32 %v38, %v38
    %v576 = vmul.f32 %v40, %v40
    %v577 = vmul.f32 %v42, %v42
    %v578 = vmul.f32 %v44, %v44
    %v579 = vmul.f32 %v46, %v46
    %v580 = vmul.f32 %v48, %v48
    %v581 = vsel %vm66, %v565, 0.0
    %582 = vadd.xlane.f32.xlu0 %v581
    %v583 = vpop.xlane.xlu0 %582
    %v584 = vsel %vm66, %v566, 0.0
    %585 = vadd.xlane.f32.xlu0 %v584
    %v586 = vpop.xlane.xlu0 %585
    %v587 = vsel %vm66, %v567, 0.0
    %588 = vadd.xlane.f32.xlu0 %v587
    %v589 = vpop.xlane.xlu0 %588
    %v590 = vsel %vm66, %v568, 0.0
    %591 = vadd.xlane.f32.xlu0 %v590
    %v592 = vpop.xlane.xlu0 %591
    %v593 = vsel %vm66, %v569, 0.0
    %594 = vadd.xlane.f32.xlu0 %v593
    %v595 = vpop.xlane.xlu0 %594
    %v596 = vsel %vm66, %v570, 0.0
    %597 = vadd.xlane.f32.xlu0 %v596
    %v598 = vpop.xlane.xlu0 %597
    %v599 = vsel %vm66, %v571, 0.0
    %600 = vadd.xlane.f32.xlu0 %v599
    %v601 = vpop.xlane.xlu0 %600
    %v602 = vsel %vm66, %v572, 0.0
    %603 = vadd.xlane.f32.xlu0 %v602
    %v604 = vpop.xlane.xlu0 %603
    %v605 = vsel %vm66, %v573, 0.0
    %606 = vadd.xlane.f32.xlu0 %v605
    %v607 = vpop.xlane.xlu0 %606
    %v608 = vsel %vm66, %v574, 0.0
    %609 = vadd.xlane.f32.xlu0 %v608
    %v610 = vpop.xlane.xlu0 %609
    %v611 = vsel %vm66, %v575, 0.0
    %612 = vadd.xlane.f32.xlu0 %v611
    %v613 = vpop.xlane.xlu0 %612
    %v614 = vsel %vm66, %v576, 0.0
    %615 = vadd.xlane.f32.xlu0 %v614
    %v616 = vpop.xlane.xlu0 %615
    %v617 = vsel %vm66, %v577, 0.0
    %618 = vadd.xlane.f32.xlu0 %v617
    %v619 = vpop.xlane.xlu0 %618
    %v620 = vsel %vm66, %v578, 0.0
    %621 = vadd.xlane.f32.xlu0 %v620
    %v622 = vpop.xlane.xlu0 %621
    %v623 = vsel %vm66, %v579, 0.0
    %624 = vadd.xlane.f32.xlu0 %v623
    %v625 = vpop.xlane.xlu0 %624
    %v626 = vsel %vm66, %v580, 0.0
    %627 = vadd.xlane.f32.xlu0 %v626
    %v628 = vpop.xlane.xlu0 %627
    %v629 = vmul.f32 %v19, %v19
    %v630 = vmul.f32 %v21, %v21
    %v631 = vmul.f32 %v23, %v23
    %v632 = vmul.f32 %v25, %v25
    %v633 = vmul.f32 %v27, %v27
    %v634 = vmul.f32 %v29, %v29
    %v635 = vmul.f32 %v31, %v31
    %v636 = vmul.f32 %v33, %v33
    %v637 = vmul.f32 %v35, %v35
    %v638 = vmul.f32 %v37, %v37
    %v639 = vmul.f32 %v39, %v39
    %v640 = vmul.f32 %v41, %v41
    %v641 = vmul.f32 %v43, %v43
    %v642 = vmul.f32 %v45, %v45
    %v643 = vmul.f32 %v47, %v47
    %v644 = vmul.f32 %v49, %v49
    %v645 = vsel %vm66, %v629, 0.0
    %646 = vadd.xlane.f32.xlu0 %v645
    %v647 = vpop.xlane.xlu0 %646
    %v648 = vsel %vm66, %v630, 0.0
    %649 = vadd.xlane.f32.xlu0 %v648
    %v650 = vpop.xlane.xlu0 %649
    %v651 = vsel %vm66, %v631, 0.0
    %652 = vadd.xlane.f32.xlu0 %v651
    %v653 = vpop.xlane.xlu0 %652
    %v654 = vsel %vm66, %v632, 0.0
    %655 = vadd.xlane.f32.xlu0 %v654
    %v656 = vpop.xlane.xlu0 %655
    %v657 = vsel %vm66, %v633, 0.0
    %658 = vadd.xlane.f32.xlu0 %v657
    %v659 = vpop.xlane.xlu0 %658
    %v660 = vsel %vm66, %v634, 0.0
    %661 = vadd.xlane.f32.xlu0 %v660
    %v662 = vpop.xlane.xlu0 %661
    %v663 = vsel %vm66, %v635, 0.0
    %664 = vadd.xlane.f32.xlu0 %v663
    %v665 = vpop.xlane.xlu0 %664
    %v666 = vsel %vm66, %v636, 0.0
    %667 = vadd.xlane.f32.xlu0 %v666
    %v668 = vpop.xlane.xlu0 %667
    %v669 = vsel %vm66, %v637, 0.0
    %670 = vadd.xlane.f32.xlu0 %v669
    %v671 = vpop.xlane.xlu0 %670
    %v672 = vsel %vm66, %v638, 0.0
    %673 = vadd.xlane.f32.xlu0 %v672
    %v674 = vpop.xlane.xlu0 %673
    %v675 = vsel %vm66, %v639, 0.0
    %676 = vadd.xlane.f32.xlu0 %v675
    %v677 = vpop.xlane.xlu0 %676
    %v678 = vsel %vm66, %v640, 0.0
    %679 = vadd.xlane.f32.xlu0 %v678
    %v680 = vpop.xlane.xlu0 %679
    %v681 = vsel %vm66, %v641, 0.0
    %682 = vadd.xlane.f32.xlu0 %v681
    %v683 = vpop.xlane.xlu0 %682
    %v684 = vsel %vm66, %v642, 0.0
    %685 = vadd.xlane.f32.xlu0 %v684
    %v686 = vpop.xlane.xlu0 %685
    %v687 = vsel %vm66, %v643, 0.0
    %688 = vadd.xlane.f32.xlu0 %v687
    %v689 = vpop.xlane.xlu0 %688
    %v690 = vsel %vm66, %v644, 0.0
    %691 = vadd.xlane.f32.xlu0 %v690
    %v692 = vpop.xlane.xlu0 %691
    %v693 = vadd.f32 %v583, %v647
    %v694 = vadd.f32 %v586, %v650
    %v695 = vadd.f32 %v589, %v653
    %v696 = vadd.f32 %v592, %v656
    %v697 = vadd.f32 %v595, %v659
    %v698 = vadd.f32 %v598, %v662
    %v699 = vadd.f32 %v601, %v665
    %v700 = vadd.f32 %v604, %v668
    %v701 = vadd.f32 %v607, %v671
    %v702 = vadd.f32 %v610, %v674
    %v703 = vadd.f32 %v613, %v677
    %v704 = vadd.f32 %v616, %v680
    %v705 = vadd.f32 %v619, %v683
    %v706 = vadd.f32 %v622, %v686
    %v707 = vadd.f32 %v625, %v689
    %v708 = vadd.f32 %v628, %v692
    %v709 = vmul.f32 %v549, 0.0078125
    %v710 = vmul.f32 %v550, 0.0078125
    %v711 = vmul.f32 %v551, 0.0078125
    %v712 = vmul.f32 %v552, 0.0078125
    %v713 = vmul.f32 %v553, 0.0078125
    %v714 = vmul.f32 %v554, 0.0078125
    %v715 = vmul.f32 %v555, 0.0078125
    %v716 = vmul.f32 %v556, 0.0078125
    %v717 = vmul.f32 %v557, 0.0078125
    %v718 = vmul.f32 %v558, 0.0078125
    %v719 = vmul.f32 %v559, 0.0078125
    %v720 = vmul.f32 %v560, 0.0078125
    %v721 = vmul.f32 %v561, 0.0078125
    %v722 = vmul.f32 %v562, 0.0078125
    %v723 = vmul.f32 %v563, 0.0078125
    %v724 = vmul.f32 %v564, 0.0078125
    %v725 = vmul.f32 %v693, 0.0078125
    %v726 = vmul.f32 %v694, 0.0078125
    %v727 = vmul.f32 %v695, 0.0078125
    %v728 = vmul.f32 %v696, 0.0078125
    %v729 = vmul.f32 %v697, 0.0078125
    %v730 = vmul.f32 %v698, 0.0078125
    %v731 = vmul.f32 %v699, 0.0078125
    %v732 = vmul.f32 %v700, 0.0078125
    %v733 = vmul.f32 %v701, 0.0078125
    %v734 = vmul.f32 %v702, 0.0078125
    %v735 = vmul.f32 %v703, 0.0078125
    %v736 = vmul.f32 %v704, 0.0078125
    %v737 = vmul.f32 %v705, 0.0078125
    %v738 = vmul.f32 %v706, 0.0078125
    %v739 = vmul.f32 %v707, 0.0078125
    %v740 = vmul.f32 %v708, 0.0078125
    %v741 = vmul.f32 %v709, %v709
    %v742 = vmul.f32 %v710, %v710
    %v743 = vmul.f32 %v711, %v711
    %v744 = vmul.f32 %v712, %v712
    %v745 = vmul.f32 %v713, %v713
    %v746 = vmul.f32 %v714, %v714
    %v747 = vmul.f32 %v715, %v715
    %v748 = vmul.f32 %v716, %v716
    %v749 = vmul.f32 %v717, %v717
    %v750 = vmul.f32 %v718, %v718
    %v751 = vmul.f32 %v719, %v719
    %v752 = vmul.f32 %v720, %v720
    %v753 = vmul.f32 %v721, %v721
    %v754 = vmul.f32 %v722, %v722
    %v755 = vmul.f32 %v723, %v723
    %v756 = vmul.f32 %v724, %v724
    %v757 = vsub.f32 %v725, %v741
    %v758 = vsub.f32 %v726, %v742
    %v759 = vsub.f32 %v727, %v743
    %v760 = vsub.f32 %v728, %v744
    %v761 = vsub.f32 %v729, %v745
    %v762 = vsub.f32 %v730, %v746
    %v763 = vsub.f32 %v731, %v747
    %v764 = vsub.f32 %v732, %v748
    %v765 = vsub.f32 %v733, %v749
    %v766 = vsub.f32 %v734, %v750
    %v767 = vsub.f32 %v735, %v751
    %v768 = vsub.f32 %v736, %v752
    %v769 = vsub.f32 %v737, %v753
    %v770 = vsub.f32 %v738, %v754
    %v771 = vsub.f32 %v739, %v755
    %v772 = vsub.f32 %v740, %v756
    %v773 = vmax.f32 %v757, 0.0
    %v774 = vmax.f32 %v758, 0.0
    %v775 = vmax.f32 %v759, 0.0
    %v776 = vmax.f32 %v760, 0.0
    %v777 = vmax.f32 %v761, 0.0
    %v778 = vmax.f32 %v762, 0.0
    %v779 = vmax.f32 %v763, 0.0
    %v780 = vmax.f32 %v764, 0.0
    %v781 = vmax.f32 %v765, 0.0
    %v782 = vmax.f32 %v766, 0.0
    %v783 = vmax.f32 %v767, 0.0
    %v784 = vmax.f32 %v768, 0.0
    %v785 = vmax.f32 %v769, 0.0
    %v786 = vmax.f32 %v770, 0.0
    %v787 = vmax.f32 %v771, 0.0
    %v788 = vmax.f32 %v772, 0.0
    %v789 = vadd.f32 %v773, 1e-05
    %v790 = vadd.f32 %v774, 1e-05
    %v791 = vadd.f32 %v775, 1e-05
    %v792 = vadd.f32 %v776, 1e-05
    %v793 = vadd.f32 %v777, 1e-05
    %v794 = vadd.f32 %v778, 1e-05
    %v795 = vadd.f32 %v779, 1e-05
    %v796 = vadd.f32 %v780, 1e-05
    %v797 = vadd.f32 %v781, 1e-05
    %v798 = vadd.f32 %v782, 1e-05
    %v799 = vadd.f32 %v783, 1e-05
    %v800 = vadd.f32 %v784, 1e-05
    %v801 = vadd.f32 %v785, 1e-05
    %v802 = vadd.f32 %v786, 1e-05
    %v803 = vadd.f32 %v787, 1e-05
    %v804 = vadd.f32 %v788, 1e-05
    %v805 = vrsqrt.pop %v789
    %v806 = vrsqrt.pop %v790
    %v807 = vrsqrt.pop %v791
    %v808 = vrsqrt.pop %v792
    %v809 = vrsqrt.pop %v793
    %v810 = vrsqrt.pop %v794
    %v811 = vrsqrt.pop %v795
    %v812 = vrsqrt.pop %v796
    %v813 = vrsqrt.pop %v797
    %v814 = vrsqrt.pop %v798
    %v815 = vrsqrt.pop %v799
    %v816 = vrsqrt.pop %v800
    %v817 = vrsqrt.pop %v801
    %v818 = vrsqrt.pop %v802
    %v819 = vrsqrt.pop %v803
    %v820 = vrsqrt.pop %v804
    %v821 = vld [vmem:[%s3] sm:$0x1]
    %v822 = vld [vmem:[%s3 + $0x1] sm:$0x1]
    %v823 = vlaneseq
    %v824 = vshrl.u32 %v823, 7
    %v825 = vsub.s32 0, %v824
    %v826 = vrot.slane %v821, %v825
    %v827 = vmul.f32 %v709, %v826
    %v828 = vmul.f32 %v710, %v826
    %v829 = vmul.f32 %v711, %v826
    %v830 = vmul.f32 %v712, %v826
    %v831 = vmul.f32 %v713, %v826
    %v832 = vmul.f32 %v714, %v826
    %v833 = vmul.f32 %v715, %v826
    %v834 = vmul.f32 %v716, %v826
    %v835 = vmul.f32 %v717, %v826
    %v836 = vmul.f32 %v718, %v826
    %v837 = vmul.f32 %v719, %v826
    %v838 = vmul.f32 %v720, %v826
    %v839 = vmul.f32 %v721, %v826
    %v840 = vmul.f32 %v722, %v826
    %v841 = vmul.f32 %v723, %v826
    %v842 = vmul.f32 %v724, %v826
    %v843 = vsub.f32 %v375, %v827
    %v844 = vsub.f32 %v380, %v828
    %v845 = vsub.f32 %v385, %v829
    %v846 = vsub.f32 %v390, %v830
    %v847 = vsub.f32 %v395, %v831
    %v848 = vsub.f32 %v400, %v832
    %v849 = vsub.f32 %v405, %v833
    %v850 = vsub.f32 %v410, %v834
    %v851 = vsub.f32 %v415, %v835
    %v852 = vsub.f32 %v420, %v836
    %v853 = vsub.f32 %v425, %v837
    %v854 = vsub.f32 %v430, %v838
    %v855 = vsub.f32 %v435, %v839
    %v856 = vsub.f32 %v440, %v840
    %v857 = vsub.f32 %v445, %v841
    %v858 = vsub.f32 %v450, %v842
    %v859 = vmul.f32 %v843, %v805
    %v860 = vmul.f32 %v844, %v806
    %v861 = vmul.f32 %v845, %v807
    %v862 = vmul.f32 %v846, %v808
    %v863 = vmul.f32 %v847, %v809
    %v864 = vmul.f32 %v848, %v810
    %v865 = vmul.f32 %v849, %v811
    %v866 = vmul.f32 %v850, %v812
    %v867 = vmul.f32 %v851, %v813
    %v868 = vmul.f32 %v852, %v814
    %v869 = vmul.f32 %v853, %v815
    %v870 = vmul.f32 %v854, %v816
    %v871 = vmul.f32 %v855, %v817
    %v872 = vmul.f32 %v856, %v818
    %v873 = vmul.f32 %v857, %v819
    %v874 = vmul.f32 %v858, %v820
    %v875 = vlaneseq
    %v876 = vshrl.u32 %v875, 7
    %v877 = vsub.s32 0, %v876
    %v878 = vrot.slane %v822, %v877
    %v879 = vadd.f32 %v859, %v878
    %v880 = vadd.f32 %v860, %v878
    %v881 = vadd.f32 %v861, %v878
    %v882 = vadd.f32 %v862, %v878
    %v883 = vadd.f32 %v863, %v878
    %v884 = vadd.f32 %v864, %v878
    %v885 = vadd.f32 %v865, %v878
    %v886 = vadd.f32 %v866, %v878
    %v887 = vadd.f32 %v867, %v878
    %v888 = vadd.f32 %v868, %v878
    %v889 = vadd.f32 %v869, %v878
    %v890 = vadd.f32 %v870, %v878
    %v891 = vadd.f32 %v871, %v878
    %v892 = vadd.f32 %v872, %v878
    %v893 = vadd.f32 %v873, %v878
    %v894 = vadd.f32 %v874, %v878
    %895 = vst.msk [vmem:[#allocation2] sm:$0xff] %vm66, %v879
    %896 = vst.msk [vmem:[#allocation2 + $0x8] sm:$0xff] %vm66, %v880
    %897 = vst.msk [vmem:[#allocation2 + $0x10] sm:$0xff] %vm66, %v881
    %898 = vst.msk [vmem:[#allocation2 + $0x18] sm:$0xff] %vm66, %v882
    %899 = vst.msk [vmem:[#allocation2 + $0x20] sm:$0xff] %vm66, %v883
    %900 = vst.msk [vmem:[#allocation2 + $0x28] sm:$0xff] %vm66, %v884
    %901 = vst.msk [vmem:[#allocation2 + $0x30] sm:$0xff] %vm66, %v885
    %902 = vst.msk [vmem:[#allocation2 + $0x38] sm:$0xff] %vm66, %v886
    %903 = vst.msk [vmem:[#allocation2 + $0x40] sm:$0xff] %vm66, %v887
    %904 = vst.msk [vmem:[#allocation2 + $0x48] sm:$0xff] %vm66, %v888
    %905 = vst.msk [vmem:[#allocation2 + $0x50] sm:$0xff] %vm66, %v889
    %906 = vst.msk [vmem:[#allocation2 + $0x58] sm:$0xff] %vm66, %v890
    %907 = vst.msk [vmem:[#allocation2 + $0x60] sm:$0xff] %vm66, %v891
    %908 = vst.msk [vmem:[#allocation2 + $0x68] sm:$0xff] %vm66, %v892
    %909 = vst.msk [vmem:[#allocation2 + $0x70] sm:$0xff] %vm66, %v893
    %910 = vst.msk [vmem:[#allocation2 + $0x78] sm:$0xff] %vm66, %v894
    // Predicated region
    $region18: #{patch_merging.1} parent=1 // pred_check
      _
    $region19: #{patch_merging.1} parent=1 // pred_check_branch
      %912 = sbr.rel (0) target = $region21
    $region20: #{patch_merging.1} parent=1 // pred_region
      %s914 = ssub.s32 2048, 2048
      %915 = vsyncadd [#allocation3], %s914
      %s916 = sshll.u32 [#allocation2], 4
      %s917 = int_to_ptr.vmem [resolvable:$true] %s916
      %922 = dma.vmem_to_hbm [thread:$0]  %s917, 2048, %s4, [#allocation3], 128, 128, 8
    $region21: #{patch_merging.1} parent=1 // pred_fallthru
      _
    // Predicated region
    $region22: #{patch_merging.1} parent=1 // pred_check
      _
    $region23: #{patch_merging.1} parent=1 // pred_check_branch
      %924 = sbr.rel (0) target = $region25
    $region24: #{patch_merging.1} parent=1 // pred_region
      %925 = dma.done [#allocation3], 2048
    $region25: #{patch_merging.1} parent=1 // pred_fallthru
      _
    %926 = vsyncpa [#allocation3], 1

</llo_original>
